<compile_context>
chip_gen: v7x
topology: tpu7x:2x2x1
jax: 0.10.0
libtpu: 0.0.40
codegen_flags: <defaults>
</compile_context>

<pallas_src>
import jax
import jax.numpy as jnp
from jax.experimental import pallas as pl
from jax.experimental.pallas import tpu as pltpu


def _round_up(n, m):
    return -(-n // m) * m


# ----------------------------- fused kernel ---------------------------------
def _residualconv_kernel(x_ref, tt_ref, b_ref, o_ref):
    # x_ref : (C*V, Lt)             input tile; rows = flattened (channel, node)
    # tt_ref: (Nout_pad, C*V)       fused mix-prop + 1x1-conv operator (resident)
    # b_ref : (Nout_pad, 1)         bias column, f32 (resident)
    # o_ref : (Nout_pad, Lt)        output tile; rows = flattened (out-channel, node)
    acc = jnp.dot(tt_ref[...], x_ref[...], preferred_element_type=jnp.float32)
    o_ref[...] = (acc + b_ref[...]).astype(o_ref.dtype)


# ----------------------------- wrapper ---------------------------------------
def residualconv_forward(x, adj, w, b, *, gdep, alpha, block_l=512):
    """x: (N, C, V, L) NCHW; adj: (V, V); w: (c_out, (gdep+1)*C); b: (c_out,)."""
    N, C, V, L = x.shape
    c_out = w.shape[0]
    assert w.shape[1] == (gdep + 1) * C
    compute_dtype = x.dtype

    K = C * V                 # contraction dim (flattened (channel, node))
    Nout = c_out * V          # output rows     (flattened (out-channel, node))

    # ---- tiny wrapper precompute, all on (V,V)/(Nout,K)-sized data, in f32 ----
    # Row-normalized adjacency:  A = (adj + I) / rowsum.
    a = adj.astype(jnp.float32) + jnp.eye(V, dtype=jnp.float32)
    a = a / jnp.sum(a, axis=1, keepdims=True)
    # Mix-prop operators (per pixel, over the node axis):  h_d = M_d @ x,
    #   M_0 = I,  M_{d+1} = alpha*I + (1 - alpha) * A @ M_d.
    eye = jnp.eye(V, dtype=jnp.float32)
    ms = [eye]
    for _ in range(gdep):
        ms.append(alpha * eye + (1.0 - alpha) * (a @ ms[-1]))
    md = jnp.stack(ms)                                        # (gdep+1, V, V)
    # Fused operator:  T[(o,v),(c,w)] = sum_d W[o, d*C+c] * M_d[v, w]
    # so that  out[n, o, v, l] = sum_{c,w} T[(o,v),(c,w)] * x[n, c, w, l] + b[o].
    # NOTE: keep this fully-folded form while K=C*V and Nout=c_out*V are small
    # (<= ~512); for very large graphs a per-depth X @ M_d^T formulation costs
    # fewer FLOPs and should replace it.
    w_r = w.astype(jnp.float32).reshape(c_out, gdep + 1, C)   # (o, d, c)
    tt = jnp.einsum("odc,dvw->ovcw", w_r, md).reshape(Nout, K)
    b_col = jnp.repeat(b.astype(jnp.float32), V).reshape(Nout, 1)

    # Pad output rows to a sublane multiple of 8 (padded rows are sliced off below).
    nout_pad = _round_up(Nout, 8)
    if nout_pad != Nout:
        tt = jnp.pad(tt, ((0, nout_pad - Nout), (0, 0)))
        b_col = jnp.pad(b_col, ((0, nout_pad - Nout), (0, 0)))
    tt = tt.astype(compute_dtype)

    # ---- lane-dense data layout: (N, C*V, L) -- a FREE reshape of NCHW ----
    x_f = x.reshape(N, K, L)
    lt = _round_up(min(block_l, _round_up(L, 128)), 128)      # lane tile, multiple of 128
    l_pad = _round_up(L, lt)
    if l_pad != L:
        x_f = jnp.pad(x_f, ((0, 0), (0, 0), (0, l_pad - L)))  # never read past the input

    grid = (N, l_pad // lt)
    out_f = pl.pallas_call(
        _residualconv_kernel,
        out_shape=jax.ShapeDtypeStruct((N, nout_pad, l_pad), compute_dtype),
        grid=grid,
        in_specs=[
            pl.BlockSpec((None, K, lt), lambda n, j: (n, 0, j)),   # x tile (pipelined)
            pl.BlockSpec((nout_pad, K), lambda n, j: (0, 0)),      # fused T (resident)
            pl.BlockSpec((nout_pad, 1), lambda n, j: (0, 0)),      # bias    (resident)
        ],
        out_specs=pl.BlockSpec((None, nout_pad, lt), lambda n, j: (n, 0, j)),
        compiler_params=pltpu.CompilerParams(
            # independent tiles -> megacore / v7x's 2 TCs can split both axes
            dimension_semantics=("parallel", "parallel"),
        ),
    )(x_f, tt, b_col)

    if nout_pad != Nout or l_pad != L:
        out_f = out_f[:, :Nout, :L]
    return out_f.reshape(N, c_out, V, L)      # free view: (out-channel, node) split back


# ----------------------------- pure-JAX reference ----------------------------
def residualconv_reference(x, adj, w, b, *, gdep, alpha):
    V = adj.shape[0]
    a = adj + jnp.eye(V, dtype=adj.dtype)
    a = a / a.sum(1)[:, None]
    h = x
    out = [h]
    for _ in range(gdep):
        h = alpha * x + (1.0 - alpha) * jnp.einsum("ncwl,vw->ncvl", h, a)
        out.append(h)
    ho = jnp.concatenate(out, axis=1)
    return jnp.einsum("oc,ncvl->novl", w, ho) + b[None, :, None, None]


if __name__ == "__main__":
    key = jax.random.PRNGKey(0)
    k1, k2, k3, k4 = jax.random.split(key, 4)

    # module config: residualconv(c_in=4, c_out=8, gdep=2, dropout=0.3, alpha=0.05)
    N, C, V, L = 2, 4, 16, 256
    gdep, alpha, c_out = 2, 0.05, 8

    x = jax.random.normal(k1, (N, C, V, L), dtype=jnp.float32)
    adj = jnp.abs(jax.random.normal(k2, (V, V), dtype=jnp.float32))
    w = 0.1 * jax.random.normal(k3, (c_out, (gdep + 1) * C), dtype=jnp.float32)
    b = 0.1 * jax.random.normal(k4, (c_out,), dtype=jnp.float32)

    y_ref = residualconv_reference(x, adj, w, b, gdep=gdep, alpha=alpha)

    # f32 path, multi-step grid: block_l=128 -> grid (2, 2), exercises pipelining.
    y = residualconv_forward(x, adj, w, b, gdep=gdep, alpha=alpha, block_l=128)
    jax.block_until_ready(y)
    assert y.shape == (N, c_out, V, L), y.shape
    err = float(jnp.max(jnp.abs(y - y_ref)))
    assert jnp.allclose(y, y_ref, atol=5e-4, rtol=5e-4), err

    # f32 path, default tile + ragged-L (padded in wrapper, sliced back).
    y2 = residualconv_forward(x[..., :200], adj, w, b, gdep=gdep, alpha=alpha)
    jax.block_until_ready(y2)
    err2 = float(jnp.max(jnp.abs(y2 - y_ref[..., :200])))
    assert jnp.allclose(y2, y_ref[..., :200], atol=5e-4, rtol=5e-4), err2

    # bf16 I/O path: bf16 MXU operands / halved HBM traffic, f32 accumulation.
    y_bf = residualconv_forward(x.astype(jnp.bfloat16), adj, w, b, gdep=gdep, alpha=alpha)
    jax.block_until_ready(y_bf)
    err_bf = float(jnp.max(jnp.abs(y_bf.astype(jnp.float32) - y_ref)))
    assert jnp.allclose(y_bf.astype(jnp.float32), y_ref, atol=1e-1, rtol=1e-1), err_bf

    print("KERNEL_OK")
</pallas_src>

<mosaic_0001>
module attributes {stable_mosaic.version = 11 : i64} {
  func.func @_residualconv_kernel(%arg0: i32, %arg1: i32, %arg2: memref<1x64x128xf32, #tpu.memory_space<vmem>>, %arg3: memref<128x64xf32, #tpu.memory_space<vmem>>, %arg4: memref<128x1xf32, #tpu.memory_space<vmem>>, %arg5: memref<1x128x128xf32, #tpu.memory_space<vmem>>) attributes {dimension_semantics = [#tpu.dimension_semantics<parallel>, #tpu.dimension_semantics<parallel>], iteration_bounds = array<i64: 2, 2>, scalar_prefetch = 0 : i64, scratch_operands = 0 : i64, tpu.core_type = #tpu.core_type<tc>, window_params = [{transform_indices = @transform_0, window_bounds = array<i64: 1, 64, 128>}, {pipeline_mode = #tpu.pipeline_mode<synchronous>, transform_indices = @transform_1, window_bounds = array<i64: 128, 64>}, {pipeline_mode = #tpu.pipeline_mode<synchronous>, transform_indices = @transform_2, window_bounds = array<i64: 128, 1>}, {transform_indices = @transform_3, window_bounds = array<i64: 1, 128, 128>}]} {
    %c0 = arith.constant 0 : index
    %c0_0 = arith.constant 0 : index
    %0 = vector.load %arg3[%c0, %c0_0] : memref<128x64xf32, #tpu.memory_space<vmem>>, vector<128x64xf32>
    %c0_1 = arith.constant 0 : index
    %c0_2 = arith.constant 0 : index
    %c0_3 = arith.constant 0 : index
    %1 = vector.load %arg2[%c0_1, %c0_2, %c0_3] : memref<1x64x128xf32, #tpu.memory_space<vmem>>, vector<1x64x128xf32>
    %2 = vector.shape_cast %1 : vector<1x64x128xf32> to vector<64x128xf32>
    %cst = arith.constant dense<0.000000e+00> : vector<128x128xf32>
    %3 = tpu.matmul %0, %2, %cst {dimension_numbers = #tpu.dot_dimension_numbers<[1], [0], [0], [1], [0, 0, 1, 1], [], []>} : vector<128x64xf32>, vector<64x128xf32>, vector<128x128xf32> -> vector<128x128xf32>
    %c0_4 = arith.constant 0 : index
    %c0_5 = arith.constant 0 : index
    %4 = vector.load %arg4[%c0_4, %c0_5] : memref<128x1xf32, #tpu.memory_space<vmem>>, vector<128x1xf32>
    %5 = vector.broadcast %4 : vector<128x1xf32> to vector<128x128xf32>
    %6 = arith.addf %3, %5 : vector<128x128xf32>
    %c0_6 = arith.constant 0 : index
    %c0_7 = arith.constant 0 : index
    %c0_8 = arith.constant 0 : index
    %7 = vector.load %arg5[%c0_6, %c0_7, %c0_8] : memref<1x128x128xf32, #tpu.memory_space<vmem>>, vector<1x128x128xf32>
    %8 = vector.shape_cast %7 : vector<1x128x128xf32> to vector<128x128xf32>
    %9 = vector.shape_cast %6 : vector<128x128xf32> to vector<1x128x128xf32>
    tpu.vector_store %arg5[%c0_6, %c0_7, %c0_8], %9 {strides = array<i32>} : memref<1x128x128xf32, #tpu.memory_space<vmem>>, vector<1x128x128xf32>,
    return
  }
  func.func @transform_0(%arg0: i32, %arg1: i32) -> (i32, i32, i32) {
    %c0_i32 = arith.constant 0 : i32
    %c0_i32_0 = arith.constant 0 : i32
    return %arg0, %c0_i32, %arg1 : i32, i32, i32
  }
  func.func @transform_1(%arg0: i32, %arg1: i32) -> (i32, i32) {
    %c0_i32 = arith.constant 0 : i32
    %c0_i32_0 = arith.constant 0 : i32
    %c0_i32_1 = arith.constant 0 : i32
    return %c0_i32, %c0_i32_0 : i32, i32
  }
  func.func @transform_2(%arg0: i32, %arg1: i32) -> (i32, i32) {
    %c0_i32 = arith.constant 0 : i32
    %c0_i32_0 = arith.constant 0 : i32
    %c0_i32_1 = arith.constant 0 : i32
    return %c0_i32, %c0_i32_0 : i32, i32
  }
  func.func @transform_3(%arg0: i32, %arg1: i32) -> (i32, i32, i32) {
    %c0_i32 = arith.constant 0 : i32
    %c0_i32_0 = arith.constant 0 : i32
    return %arg0, %c0_i32, %arg1 : i32, i32, i32
  }
}

</mosaic_0001>

<llo_original>
// kernel: tpu_custom_call.1
$region0: #{tpu_custom_call.1}
  #allocation0 [shape = 'u32[]', space=smem, size = 0x4, offset = 0x4, fixed_abs, tag = 'smem constant byte address 0x4 - core index']
  #allocation1 [shape = 'u32[144,128]{1,0:T(1,128)}', space=vmem, size = 0x12000, scoped, tag = 'internal scratch']
  %s0 = inlined_call_operand.vmem [shape: f32[2,64,256], index: 0, kind: input, shape index: {}]
  %s1 = inlined_call_operand.vmem [shape: f32[128,64], index: 1, kind: input, shape index: {}]
  %s2 = inlined_call_operand.vmem [shape: f32[128,1], index: 2, kind: input, shape index: {}]
  %s3 = inlined_call_operand.hbm [shape: f32[2,128,256], index: 3, kind: output, shape index: {}]
  %s4 = sld [smem:[#allocation0]]
  $region83: #{tpu_custom_call.1} parent=0
    _
  %s6 = ssub.s32 1, %s4
  %s7 = scalar_select 0, %s6, %s4
  $region1: #{tpu_custom_call.1} parent=0
    #allocation2 [shape = 'u8[65536]{0}', space=vmem, size = 0x10000, scoped, tag = 'input window, operand 0']
    #allocation3 [shape = 'u8[131072]{0}', space=vmem, size = 0x20000, scoped, tag = 'output window, operand 0']
    #allocation4 [shape = 's32[2]{0}', space=sflag, size = 0x8, scoped, tag = 'scoped memory for tpu_custom_call.1']
    %8 = vsyncpa [#allocation4], 0
    %s9 = scalar_lea.sflag [#allocation4], 1
    %10 = vsyncpa %s9, 0
    loop: start=0, step=1, limit=6
    $region2: #{tpu_custom_call.1} parent=1 // loop_pre_header
      _
    $region3: #{tpu_custom_call.1} parent=1 // loop_header
      %s12 = sphi 0, %s16
      %p13 = scmp.ge.s32.totalorder %s12, 6
      %s19 = sphi 0, %s31
      %s20 = sphi 0, %s27
      %s21 = sphi 0, %s19
      %s22 = sphi 0, %s20
      %s23 = sphi 0, %s21
      %s24 = sphi 0, %s22
      %s36 = sphi 0, %s38
      %s39 = sphi 0, %s36
      %s40 = sphi 0, %s39
      %s56 = sphi 0, %s40
      %s60 = sphi 0, %s60
      %s62 = sphi 0, %s60
      %s63 = sphi 0, %s62
      %s77 = sphi 0, %s63
      %s81 = sphi 0, %s81
      %s83 = sphi 0, %s81
      %s84 = sphi 0, %s83
      %s98 = sphi 0, %s84
      %s106 = sphi 0, %s108
      %s109 = sphi 0, %s106
      %s110 = sphi 0, %s109
      %s126 = sphi 0, %s110
    $region4: #{tpu_custom_call.1} parent=1 // loop_header_branch
      %15 = sbr.rel (%p13) target = $region8
    $region5: #{tpu_custom_call.1} parent=1 // loop_body
      %s17 = ssub.s32 %s12, 1
      %s18 = ssub.s32 %s12, 2
      %s25 = sadd.s32 1, %s20
      %p26 = scmp.ge.s32.totalorder %s25, 2
      %s27 = scalar_select %p26, 0, %s25
      %s28 = sadd.s32 1, %s19
      %s29 = scalar_select %p26, %s28, %s19
      %p30 = scmp.ge.s32.totalorder %s29, 2
      %s31 = scalar_select %p30, 0, %s29
      %s32 = ssub.s32 %s19, %s31
      %s33 = ssub.s32 %s20, %s27
      %s34 = sor.u32 %s32, %s33
      %p35 = scmp.eq.s32.totalorder %s34, 0
      %s37 = sadd.s32 %s36, 1
      %s38 = scalar_select %p35, %s36, %s37
      %p41 = pneg %p35
      %p42 = scmp.eq.s32.totalorder %s12, 3
      %p43 = por %p41, %p42
      %p44 = scmp.ne.s32.totalorder %s36, %s39
      %p45 = scmp.eq.s32.totalorder %s12, 0
      %p46 = por %p44, %p45
      %p47 = scmp.ne.s32.totalorder %s36, %s39
      %p48 = scmp.eq.s32.totalorder %s17, 3
      %p49 = por %p47, %p48
      %p50 = scmp.ne.s32.totalorder %s39, %s40
      %p51 = scmp.eq.s32.totalorder %s17, 0
      %p52 = por %p50, %p51
      %p53 = scmp.ne.s32.totalorder %s39, %s40
      %p54 = scmp.eq.s32.totalorder %s18, 3
      %p55 = por %p53, %p54
      %p57 = scmp.ne.s32.totalorder %s40, %s56
      %p58 = scmp.eq.s32.totalorder %s18, 0
      %p59 = por %p57, %p58
      %s61 = sadd.s32 %s60, 1
      %p64 = scmp.eq.s32.totalorder %s12, 3
      %p65 = scmp.ne.s32.totalorder %s60, %s62
      %p66 = scmp.eq.s32.totalorder %s12, 0
      %p67 = por %p65, %p66
      %p68 = scmp.ne.s32.totalorder %s60, %s62
      %p69 = scmp.eq.s32.totalorder %s17, 3
      %p70 = por %p68, %p69
      %p71 = scmp.ne.s32.totalorder %s62, %s63
      %p72 = scmp.eq.s32.totalorder %s17, 0
      %p73 = por %p71, %p72
      %p74 = scmp.ne.s32.totalorder %s62, %s63
      %p75 = scmp.eq.s32.totalorder %s18, 3
      %p76 = por %p74, %p75
      %p78 = scmp.ne.s32.totalorder %s63, %s77
      %p79 = scmp.eq.s32.totalorder %s18, 0
      %p80 = por %p78, %p79
      %s82 = sadd.s32 %s81, 1
      %p85 = scmp.eq.s32.totalorder %s12, 3
      %p86 = scmp.ne.s32.totalorder %s81, %s83
      %p87 = scmp.eq.s32.totalorder %s12, 0
      %p88 = por %p86, %p87
      %p89 = scmp.ne.s32.totalorder %s81, %s83
      %p90 = scmp.eq.s32.totalorder %s17, 3
      %p91 = por %p89, %p90
      %p92 = scmp.ne.s32.totalorder %s83, %s84
      %p93 = scmp.eq.s32.totalorder %s17, 0
      %p94 = por %p92, %p93
      %p95 = scmp.ne.s32.totalorder %s83, %s84
      %p96 = scmp.eq.s32.totalorder %s18, 3
      %p97 = por %p95, %p96
      %p99 = scmp.ne.s32.totalorder %s84, %s98
      %p100 = scmp.eq.s32.totalorder %s18, 0
      %p101 = por %p99, %p100
      %s102 = ssub.s32 %s19, %s31
      %s103 = ssub.s32 %s20, %s27
      %s104 = sor.u32 %s102, %s103
      %p105 = scmp.eq.s32.totalorder %s104, 0
      %s107 = sadd.s32 %s106, 1
      %s108 = scalar_select %p105, %s106, %s107
      %p111 = pneg %p105
      %p112 = scmp.eq.s32.totalorder %s12, 3
      %p113 = por %p111, %p112
      %p114 = scmp.ne.s32.totalorder %s106, %s109
      %p115 = scmp.eq.s32.totalorder %s12, 0
      %p116 = por %p114, %p115
      %p117 = scmp.ne.s32.totalorder %s106, %s109
      %p118 = scmp.eq.s32.totalorder %s17, 3
      %p119 = por %p117, %p118
      %p120 = scmp.ne.s32.totalorder %s109, %s110
      %p121 = scmp.eq.s32.totalorder %s17, 0
      %p122 = por %p120, %p121
      %p123 = scmp.ne.s32.totalorder %s109, %s110
      %p124 = scmp.eq.s32.totalorder %s18, 3
      %p125 = por %p123, %p124
      %p127 = scmp.ne.s32.totalorder %s110, %s126
      %p128 = scmp.eq.s32.totalorder %s18, 0
      %p129 = por %p127, %p128
      %p130 = scmp.le.s32.totalorder 1, %s12
      %p131 = scmp.lt.s32.totalorder %s12, 5
      %p132 = pnand %p130, %p131
      %p133 = pneg %p132
      // Predicated region
      $region9: #{tpu_custom_call.1} parent=5 // pred_check
        _
      $region10: #{tpu_custom_call.1} parent=5 // pred_check_branch
        %135 = sbr.rel (%p132) target = $region12
      $region11: #{tpu_custom_call.1} parent=5 // pred_region
        %s136 = ssub.s32 %s12, 1
        // Predicated region
        $region13: #{tpu_custom_call.1} parent=11 // pred_check
          %p137 = pneg %p73
        $region14: #{tpu_custom_call.1} parent=11 // pred_check_branch
          %139 = sbr.rel (%p137) target = $region16
        $region15: #{tpu_custom_call.1} parent=11 // pred_region
          _
        $region16: #{tpu_custom_call.1} parent=11 // pred_fallthru
          _
        // Predicated region
        $region17: #{tpu_custom_call.1} parent=11 // pred_check
          %p140 = pneg %p94
        $region18: #{tpu_custom_call.1} parent=11 // pred_check_branch
          %142 = sbr.rel (%p140) target = $region20
        $region19: #{tpu_custom_call.1} parent=11 // pred_region
          _
        $region20: #{tpu_custom_call.1} parent=11 // pred_fallthru
          _
      $region12: #{tpu_custom_call.1} parent=5 // pred_fallthru
        _
      %p143 = scmp.lt.s32.totalorder %s12, 4
      // Predicated region
      $region21: #{tpu_custom_call.1} parent=5 // pred_check
        %p144 = pneg %p143
      $region22: #{tpu_custom_call.1} parent=5 // pred_check_branch
        %146 = sbr.rel (%p144) target = $region24
      $region23: #{tpu_custom_call.1} parent=5 // pred_region
        // Predicated region
        $region25: #{tpu_custom_call.1} parent=23 // pred_check
          %p147 = pneg %p46
        $region26: #{tpu_custom_call.1} parent=23 // pred_check_branch
          %149 = sbr.rel (%p147) target = $region28
        $region27: #{tpu_custom_call.1} parent=23 // pred_region
          %s150 = sand.u32 %s36, 1
          %s151 = sand.u32 %s36, 1
          %s152 = smul.addr %s151, 64
          %s153 = scalar_lea.vmem [#allocation2], %s152
          %s154 = smul.addr %s19, 16
          %s155 = sadd.s32 %s20, %s154
          %s156 = smul.addr %s155, 8
          %s157 = scalar_lea.vmem %s0, %s156
          // Predicated region
          $region29: #{tpu_custom_call.1} parent=27 // pred_check
            _
          $region30: #{tpu_custom_call.1} parent=27 // pred_check_branch
            %159 = sbr.rel (0) target = $region32
          $region31: #{tpu_custom_call.1} parent=27 // pred_region
            // Predicated region
            $region33: #{tpu_custom_call.1} parent=31 // pred_check
              _
            $region34: #{tpu_custom_call.1} parent=31 // pred_check_branch
              %161 = sbr.rel (0) target = $region36
            $region35: #{tpu_custom_call.1} parent=31 // pred_region
              // Predicated region
              $region48: #{tpu_custom_call.1} parent=35 // pred_check
                _
              $region49: #{tpu_custom_call.1} parent=35 // pred_check_branch
                %190 = sbr.rel (0) target = $region51
              $region50: #{tpu_custom_call.1} parent=35 // pred_region
                loop: start=0, step=1, limit=1
                $region52: #{tpu_custom_call.1} parent=50 // loop_pre_header
                  _
                $region53: #{tpu_custom_call.1} parent=50 // loop_header
                  %s192 = sphi 0, %s196
                  %p193 = scmp.ge.s32.totalorder %s192, 1
                  %s197 = sphi %s157, %s157
                  %s198 = sphi %s153, %s153
                $region54: #{tpu_custom_call.1} parent=50 // loop_header_branch
                  %195 = sbr.rel (%p193) target = $region58
                $region55: #{tpu_custom_call.1} parent=50 // loop_body
                  %v199 = vld [vmem:[%s197] sm:$0xff]
                  %200 = vst [vmem:[%s198] sm:$0xff] %v199
                  %v201 = vld [vmem:[%s197 + $0x10] sm:$0xff]
                  %202 = vst [vmem:[%s198 + $0x8] sm:$0xff] %v201
                  %v203 = vld [vmem:[%s197 + $0x20] sm:$0xff]
                  %204 = vst [vmem:[%s198 + $0x10] sm:$0xff] %v203
                  %v205 = vld [vmem:[%s197 + $0x30] sm:$0xff]
                  %206 = vst [vmem:[%s198 + $0x18] sm:$0xff] %v205
                  %v207 = vld [vmem:[%s197 + $0x40] sm:$0xff]
                  %208 = vst [vmem:[%s198 + $0x20] sm:$0xff] %v207
                  %v209 = vld [vmem:[%s197 + $0x50] sm:$0xff]
                  %210 = vst [vmem:[%s198 + $0x28] sm:$0xff] %v209
                  %v211 = vld [vmem:[%s197 + $0x60] sm:$0xff]
                  %212 = vst [vmem:[%s198 + $0x30] sm:$0xff] %v211
                  %v213 = vld [vmem:[%s197 + $0x70] sm:$0xff]
                  %214 = vst [vmem:[%s198 + $0x38] sm:$0xff] %v213
                $region56: #{tpu_custom_call.1} parent=50 // loop_footer
                  %s196 = sadd.s32 1, %s192
                $region57: #{tpu_custom_call.1} parent=50 // loop_footer_branch
                  %191 = sbr.rel target = $region53
                $region58: #{tpu_custom_call.1} parent=50 // loop_exit
                  _
              $region51: #{tpu_custom_call.1} parent=35 // pred_fallthru
                _
              // Predicated region
              $region59: #{tpu_custom_call.1} parent=35 // pred_check
                _
              $region60: #{tpu_custom_call.1} parent=35 // pred_check_branch
                %216 = sbr.rel target = $region62
              $region61: #{tpu_custom_call.1} parent=35 // pred_region
                _
              $region62: #{tpu_custom_call.1} parent=35 // pred_fallthru
                _
            $region36: #{tpu_custom_call.1} parent=31 // pred_fallthru
              _
            // Predicated region
            $region37: #{tpu_custom_call.1} parent=31 // pred_check
              _
            $region38: #{tpu_custom_call.1} parent=31 // pred_check_branch
              %163 = sbr.rel target = $region40
            $region39: #{tpu_custom_call.1} parent=31 // pred_region
              loop: start=0, step=1, limit=1
              $region41: #{tpu_custom_call.1} parent=39 // loop_pre_header
                _
              $region42: #{tpu_custom_call.1} parent=39 // loop_header
                %s166 = sphi 0, %s170
                %p167 = scmp.ge.s32.totalorder %s166, 1
                %s171 = sphi %s157, %s157
                %s172 = sphi %s153, %s153
              $region43: #{tpu_custom_call.1} parent=39 // loop_header_branch
                %169 = sbr.rel (%p167) target = $region47
              $region44: #{tpu_custom_call.1} parent=39 // loop_body
                %v173 = vld [vmem:[%s171] sm:$0xff]
                %174 = vst [vmem:[%s172] sm:$0xff] %v173
                %v175 = vld [vmem:[%s171 + $0x10] sm:$0xff]
                %176 = vst [vmem:[%s172 + $0x8] sm:$0xff] %v175
                %v177 = vld [vmem:[%s171 + $0x20] sm:$0xff]
                %178 = vst [vmem:[%s172 + $0x10] sm:$0xff] %v177
                %v179 = vld [vmem:[%s171 + $0x30] sm:$0xff]
                %180 = vst [vmem:[%s172 + $0x18] sm:$0xff] %v179
                %v181 = vld [vmem:[%s171 + $0x40] sm:$0xff]
                %182 = vst [vmem:[%s172 + $0x20] sm:$0xff] %v181
                %v183 = vld [vmem:[%s171 + $0x50] sm:$0xff]
                %184 = vst [vmem:[%s172 + $0x28] sm:$0xff] %v183
                %v185 = vld [vmem:[%s171 + $0x60] sm:$0xff]
                %186 = vst [vmem:[%s172 + $0x30] sm:$0xff] %v185
                %v187 = vld [vmem:[%s171 + $0x70] sm:$0xff]
                %188 = vst [vmem:[%s172 + $0x38] sm:$0xff] %v187
              $region45: #{tpu_custom_call.1} parent=39 // loop_footer
                %s170 = sadd.s32 1, %s166
              $region46: #{tpu_custom_call.1} parent=39 // loop_footer_branch
                %165 = sbr.rel target = $region42
              $region47: #{tpu_custom_call.1} parent=39 // loop_exit
                _
            $region40: #{tpu_custom_call.1} parent=31 // pred_fallthru
              _
          $region32: #{tpu_custom_call.1} parent=27 // pred_fallthru
            _
          %217 = vnop
        $region28: #{tpu_custom_call.1} parent=23 // pred_fallthru
          _
      $region24: #{tpu_custom_call.1} parent=5 // pred_fallthru
        _
      %p218 = scmp.le.s32.totalorder 1, %s12
      %p219 = scmp.lt.s32.totalorder %s12, 5
      %p220 = pnand %p218, %p219
      %p221 = pneg %p220
      // Predicated region
      $region63: #{tpu_custom_call.1} parent=5 // pred_check
        _
      $region64: #{tpu_custom_call.1} parent=5 // pred_check_branch
        %223 = sbr.rel (%p220) target = $region66
      $region65: #{tpu_custom_call.1} parent=5 // pred_region
        %s224 = ssub.s32 %s12, 1
        %s225 = sand.u32 %s39, 1
        %s226 = sand.u32 %s39, 1
        %s227 = smul.addr %s226, 64
        %s228 = scalar_lea.vmem [#allocation2], %s227
        // Predicated region
        $region67: #{tpu_custom_call.1} parent=65 // pred_check
          %p229 = pneg %p52
        $region68: #{tpu_custom_call.1} parent=65 // pred_check_branch
          %231 = sbr.rel (%p229) target = $region70
        $region69: #{tpu_custom_call.1} parent=65 // pred_region
          _
        $region70: #{tpu_custom_call.1} parent=65 // pred_fallthru
          _
        %s232 = sand.u32 %s39, 1
        %s233 = sand.u32 %s39, 1
        %s234 = smul.addr %s233, 64
        %s235 = scalar_lea.vmem [#allocation2], %s234
        %p236 = pneg %p52
        %p237 = pneg %p49
        %p238 = pneg %p73
        %p239 = pneg %p70
        %p240 = pneg %p94
        %p241 = pneg %p91
        %p242 = pneg %p122
        %p243 = pneg %p119
        %s244 = sand.u32 %s109, 1
        %s245 = scalar_lea.sflag [#allocation4], %s244
        %s246 = sand.u32 %s109, 1
        %s247 = smul.addr %s246, 128
        %s248 = scalar_lea.vmem [#allocation3], %s247
        %v249 = vld [vmem:[%s1] sm:$0xff]
        %v250 = vld [vmem:[%s1 + $0x8] sm:$0xff]
        %v251 = vld [vmem:[%s1 + $0x10] sm:$0xff]
        %v252 = vld [vmem:[%s1 + $0x18] sm:$0xff]
        %v253 = vld [vmem:[%s1 + $0x20] sm:$0xff]
        %v254 = vld [vmem:[%s1 + $0x28] sm:$0xff]
        %v255 = vld [vmem:[%s1 + $0x30] sm:$0xff]
        %v256 = vld [vmem:[%s1 + $0x38] sm:$0xff]
        %v257 = vld [vmem:[%s1 + $0x40] sm:$0xff]
        %v258 = vld [vmem:[%s1 + $0x48] sm:$0xff]
        %v259 = vld [vmem:[%s1 + $0x50] sm:$0xff]
        %v260 = vld [vmem:[%s1 + $0x58] sm:$0xff]
        %v261 = vld [vmem:[%s1 + $0x60] sm:$0xff]
        %v262 = vld [vmem:[%s1 + $0x68] sm:$0xff]
        %v263 = vld [vmem:[%s1 + $0x70] sm:$0xff]
        %v264 = vld [vmem:[%s1 + $0x78] sm:$0xff]
        %v265 = vld [vmem:[%s228] sm:$0xff]
        %v266 = vld [vmem:[%s228 + $0x8] sm:$0xff]
        %v267 = vld [vmem:[%s228 + $0x10] sm:$0xff]
        %v268 = vld [vmem:[%s228 + $0x18] sm:$0xff]
        %v269 = vld [vmem:[%s228 + $0x20] sm:$0xff]
        %v270 = vld [vmem:[%s228 + $0x28] sm:$0xff]
        %v271 = vld [vmem:[%s228 + $0x30] sm:$0xff]
        %v272 = vld [vmem:[%s228 + $0x38] sm:$0xff]
        %v273 = vld [vmem:[%s2] sm:$0xff]
        %v274 = vld [vmem:[%s2 + $0x8] sm:$0xff]
        %v275 = vld [vmem:[%s2 + $0x10] sm:$0xff]
        %v276 = vld [vmem:[%s2 + $0x18] sm:$0xff]
        %v277 = vld [vmem:[%s2 + $0x20] sm:$0xff]
        %v278 = vld [vmem:[%s2 + $0x28] sm:$0xff]
        %v279 = vld [vmem:[%s2 + $0x30] sm:$0xff]
        %v280 = vld [vmem:[%s2 + $0x38] sm:$0xff]
        %v281 = vld [vmem:[%s2 + $0x40] sm:$0xff]
        %v282 = vld [vmem:[%s2 + $0x48] sm:$0xff]
        %v283 = vld [vmem:[%s2 + $0x50] sm:$0xff]
        %v284 = vld [vmem:[%s2 + $0x58] sm:$0xff]
        %v285 = vld [vmem:[%s2 + $0x60] sm:$0xff]
        %v286 = vld [vmem:[%s2 + $0x68] sm:$0xff]
        %v287 = vld [vmem:[%s2 + $0x70] sm:$0xff]
        %v288 = vld [vmem:[%s2 + $0x78] sm:$0xff]
        %290 = vset.pattern.permute.xlu0 0
        %291 = vperm.xlu0 %290, %v273
        %v292 = vpop.permute.xlu0 %291
        %295 = vset.pattern.permute.xlu0 0
        %296 = vperm.xlu0 %295, %v274
        %v297 = vpop.permute.xlu0 %296
        %300 = vset.pattern.permute.xlu0 0
        %301 = vperm.xlu0 %300, %v275
        %v302 = vpop.permute.xlu0 %301
        %305 = vset.pattern.permute.xlu0 0
        %306 = vperm.xlu0 %305, %v276
        %v307 = vpop.permute.xlu0 %306
        %310 = vset.pattern.permute.xlu0 0
        %311 = vperm.xlu0 %310, %v277
        %v312 = vpop.permute.xlu0 %311
        %315 = vset.pattern.permute.xlu0 0
        %316 = vperm.xlu0 %315, %v278
        %v317 = vpop.permute.xlu0 %316
        %320 = vset.pattern.permute.xlu0 0
        %321 = vperm.xlu0 %320, %v279
        %v322 = vpop.permute.xlu0 %321
        %325 = vset.pattern.permute.xlu0 0
        %326 = vperm.xlu0 %325, %v280
        %v327 = vpop.permute.xlu0 %326
        %330 = vset.pattern.permute.xlu0 0
        %331 = vperm.xlu0 %330, %v281
        %v332 = vpop.permute.xlu0 %331
        %335 = vset.pattern.permute.xlu0 0
        %336 = vperm.xlu0 %335, %v282
        %v337 = vpop.permute.xlu0 %336
        %340 = vset.pattern.permute.xlu0 0
        %341 = vperm.xlu0 %340, %v283
        %v342 = vpop.permute.xlu0 %341
        %345 = vset.pattern.permute.xlu0 0
        %346 = vperm.xlu0 %345, %v284
        %v347 = vpop.permute.xlu0 %346
        %350 = vset.pattern.permute.xlu0 0
        %351 = vperm.xlu0 %350, %v285
        %v352 = vpop.permute.xlu0 %351
        %355 = vset.pattern.permute.xlu0 0
        %356 = vperm.xlu0 %355, %v286
        %v357 = vpop.permute.xlu0 %356
        %360 = vset.pattern.permute.xlu0 0
        %361 = vperm.xlu0 %360, %v287
        %v362 = vpop.permute.xlu0 %361
        %365 = vset.pattern.permute.xlu0 0
        %366 = vperm.xlu0 %365, %v288
        %v367 = vpop.permute.xlu0 %366
        %vm369 = vcmask 523264
        %v371 = vsel %vm369, %v249, 0
        %v374 = vsel %vm369, %v250, 0
        %v377 = vsel %vm369, %v251, 0
        %v380 = vsel %vm369, %v252, 0
        %v383 = vsel %vm369, %v253, 0
        %v386 = vsel %vm369, %v254, 0
        %v389 = vsel %vm369, %v255, 0
        %v392 = vsel %vm369, %v256, 0
        %v395 = vsel %vm369, %v257, 0
        %v398 = vsel %vm369, %v258, 0
        %v401 = vsel %vm369, %v259, 0
        %v404 = vsel %vm369, %v260, 0
        %v407 = vsel %vm369, %v261, 0
        %v410 = vsel %vm369, %v262, 0
        %v413 = vsel %vm369, %v263, 0
        %v416 = vsel %vm369, %v264, 0
        %418 = vmatprep.subr.mxu0 0.0
        %419 = vmatpush1.msra.mxu0 %v265
        %420 = vmatprep.subr.mxu0 0.0
        %421 = vmatpush1.msra.mxu0 %v266
        %422 = vmatprep.subr.mxu0 0.0
        %423 = vmatpush1.msra.mxu0 %v267
        %424 = vmatprep.subr.mxu0 0.0
        %425 = vmatpush1.msra.mxu0 %v268
        %426 = vmatprep.subr.mxu0 0.0
        %427 = vmatpush1.msra.mxu0 %v269
        %428 = vmatprep.subr.mxu0 0.0
        %429 = vmatpush1.msra.mxu0 %v270
        %430 = vmatprep.subr.mxu0 0.0
        %431 = vmatpush1.msra.mxu0 %v271
        %432 = vmatprep.subr.mxu0 0.0
        %433 = vmatpush1.msra.mxu0 %v272
        %434 = vmatprep.subr.mxu0 0.0
        %435 = vmatpush1.msra.mxu0 0.0
        %436 = vmatprep.subr.mxu0 0.0
        %437 = vmatpush1.msra.mxu0 0.0
        %438 = vmatprep.subr.mxu0 0.0
        %439 = vmatpush1.msra.mxu0 0.0
        %440 = vmatprep.subr.mxu0 0.0
        %441 = vmatpush1.msra.mxu0 0.0
        %442 = vmatprep.subr.mxu0 0.0
        %443 = vmatpush1.msra.mxu0 0.0
        %444 = vmatprep.subr.mxu0 0.0
        %445 = vmatpush1.msra.mxu0 0.0
        %446 = vmatprep.subr.mxu0 0.0
        %447 = vmatpush1.msra.mxu0 0.0
        %448 = vmatprep.subr.mxu0 0.0
        %449 = vmatpush1.msra.mxu0 0.0
        %450 = vmatprep.subr.mxu0 0.0
        %451 = vmatpush1.msra.mxu0 0.0
        %452 = vmatprep.subr.mxu0 0.0
        %453 = vmatpush1.msra.mxu0 0.0
        %454 = vmatprep.subr.mxu0 0.0
        %455 = vmatpush1.msra.mxu0 0.0
        %456 = vmatprep.subr.mxu0 0.0
        %457 = vmatpush1.msra.mxu0 0.0
        %458 = vmatprep.subr.mxu0 0.0
        %459 = vmatpush1.msra.mxu0 0.0
        %460 = vmatprep.subr.mxu0 0.0
        %461 = vmatpush1.msra.mxu0 0.0
        %462 = vmatprep.subr.mxu0 0.0
        %463 = vmatpush1.msra.mxu0 0.0
        %464 = vmatprep.subr.mxu0 0.0
        %465 = vmatpush1.msra.mxu0 0.0
        %466 = vmatprep.subr.mxu0 0.0
        %467 = vmatpush1.msra.mxu0 0.0
        %468 = vmatprep.subr.mxu0 0.0
        %469 = vmatpush1.msra.mxu0 0.0
        %470 = vmatprep.subr.mxu0 0.0
        %471 = vmatpush1.msra.mxu0 0.0
        %472 = vmatprep.subr.mxu0 0.0
        %473 = vmatpush1.msra.mxu0 0.0
        %474 = vmatprep.subr.mxu0 0.0
        %475 = vmatpush1.msra.mxu0 0.0
        %476 = vmatprep.subr.mxu0 0.0
        %477 = vmatpush1.msra.mxu0 0.0
        %478 = vmatprep.subr.mxu0 0.0
        %479 = vmatpush1.msra.mxu0 0.0
        %480 = vmatprep.subr.mxu0 0.0
        %481 = vmatpush1.msra.mxu0 0.0
        %482 = vmatprep.mubr.f32.mxu0 0.0
        %483 = vmatmul.mubr.f32.gmra.mrb[0].mxu0 %v371
        %v484 = vpop.f32.mrb[0].mxu0
        %v485 = vadd.f32 %v292, %v484
        %v486 = vpop.f32.mrb[0].mxu0
        %487 = vmatprep.mubr.f32.mxu0 0.0
        %488 = vmatmul.mubr.f32.gmra.mrb[0].mxu0 %v374
        %v489 = vpop.f32.mrb[0].mxu0
        %v490 = vadd.f32 %v297, %v489
        %v491 = vpop.f32.mrb[0].mxu0
        %492 = vmatprep.mubr.f32.mxu0 0.0
        %493 = vmatmul.mubr.f32.gmra.mrb[0].mxu0 %v377
        %v494 = vpop.f32.mrb[0].mxu0
        %v495 = vadd.f32 %v302, %v494
        %v496 = vpop.f32.mrb[0].mxu0
        %497 = vmatprep.mubr.f32.mxu0 0.0
        %498 = vmatmul.mubr.f32.gmra.mrb[0].mxu0 %v380
        %v499 = vpop.f32.mrb[0].mxu0
        %v500 = vadd.f32 %v307, %v499
        %v501 = vpop.f32.mrb[0].mxu0
        %502 = vmatprep.mubr.f32.mxu0 0.0
        %503 = vmatmul.mubr.f32.gmra.mrb[0].mxu0 %v383
        %v504 = vpop.f32.mrb[0].mxu0
        %v505 = vadd.f32 %v312, %v504
        %v506 = vpop.f32.mrb[0].mxu0
        %507 = vmatprep.mubr.f32.mxu0 0.0
        %508 = vmatmul.mubr.f32.gmra.mrb[0].mxu0 %v386
        %v509 = vpop.f32.mrb[0].mxu0
        %v510 = vadd.f32 %v317, %v509
        %v511 = vpop.f32.mrb[0].mxu0
        %512 = vmatprep.mubr.f32.mxu0 0.0
        %513 = vmatmul.mubr.f32.gmra.mrb[0].mxu0 %v389
        %v514 = vpop.f32.mrb[0].mxu0
        %v515 = vadd.f32 %v322, %v514
        %v516 = vpop.f32.mrb[0].mxu0
        %517 = vmatprep.mubr.f32.mxu0 0.0
        %518 = vmatmul.mubr.f32.gmra.mrb[0].mxu0 %v392
        %v519 = vpop.f32.mrb[0].mxu0
        %v520 = vadd.f32 %v327, %v519
        %v521 = vpop.f32.mrb[0].mxu0
        %522 = vmatprep.mubr.f32.mxu0 0.0
        %523 = vmatmul.mubr.f32.gmra.mrb[0].mxu0 %v395
        %v524 = vpop.f32.mrb[0].mxu0
        %v525 = vadd.f32 %v332, %v524
        %v526 = vpop.f32.mrb[0].mxu0
        %527 = vmatprep.mubr.f32.mxu0 0.0
        %528 = vmatmul.mubr.f32.gmra.mrb[0].mxu0 %v398
        %v529 = vpop.f32.mrb[0].mxu0
        %v530 = vadd.f32 %v337, %v529
        %v531 = vpop.f32.mrb[0].mxu0
        %532 = vmatprep.mubr.f32.mxu0 0.0
        %533 = vmatmul.mubr.f32.gmra.mrb[0].mxu0 %v401
        %v534 = vpop.f32.mrb[0].mxu0
        %v535 = vadd.f32 %v342, %v534
        %v536 = vpop.f32.mrb[0].mxu0
        %537 = vmatprep.mubr.f32.mxu0 0.0
        %538 = vmatmul.mubr.f32.gmra.mrb[0].mxu0 %v404
        %v539 = vpop.f32.mrb[0].mxu0
        %v540 = vadd.f32 %v347, %v539
        %v541 = vpop.f32.mrb[0].mxu0
        %542 = vmatprep.mubr.f32.mxu0 0.0
        %543 = vmatmul.mubr.f32.gmra.mrb[0].mxu0 %v407
        %v544 = vpop.f32.mrb[0].mxu0
        %v545 = vadd.f32 %v352, %v544
        %v546 = vpop.f32.mrb[0].mxu0
        %547 = vmatprep.mubr.f32.mxu0 0.0
        %548 = vmatmul.mubr.f32.gmra.mrb[0].mxu0 %v410
        %v549 = vpop.f32.mrb[0].mxu0
        %v550 = vadd.f32 %v357, %v549
        %v551 = vpop.f32.mrb[0].mxu0
        %552 = vmatprep.mubr.f32.mxu0 0.0
        %553 = vmatmul.mubr.f32.gmra.mrb[0].mxu0 %v413
        %v554 = vpop.f32.mrb[0].mxu0
        %v555 = vadd.f32 %v362, %v554
        %v556 = vpop.f32.mrb[0].mxu0
        %557 = vmatprep.mubr.f32.mxu0 0.0
        %558 = vmatmul.mubr.f32.gmra.mrb[0].mxu0 %v416
        %v559 = vpop.f32.mrb[0].mxu0
        %v560 = vadd.f32 %v367, %v559
        %v561 = vpop.f32.mrb[0].mxu0
        %562 = vdwg.mxu0
        %563 = vst [vmem:[%s248] sm:$0xff] %v485
        %564 = vst [vmem:[%s248 + $0x8] sm:$0xff] %v490
        %565 = vst [vmem:[%s248 + $0x10] sm:$0xff] %v495
        %566 = vst [vmem:[%s248 + $0x18] sm:$0xff] %v500
        %567 = vst [vmem:[%s248 + $0x20] sm:$0xff] %v505
        %568 = vst [vmem:[%s248 + $0x28] sm:$0xff] %v510
        %569 = vst [vmem:[%s248 + $0x30] sm:$0xff] %v515
        %570 = vst [vmem:[%s248 + $0x38] sm:$0xff] %v520
        %571 = vst [vmem:[%s248 + $0x40] sm:$0xff] %v525
        %572 = vst [vmem:[%s248 + $0x48] sm:$0xff] %v530
        %573 = vst [vmem:[%s248 + $0x50] sm:$0xff] %v535
        %574 = vst [vmem:[%s248 + $0x58] sm:$0xff] %v540
        %575 = vst [vmem:[%s248 + $0x60] sm:$0xff] %v545
        %576 = vst [vmem:[%s248 + $0x68] sm:$0xff] %v550
        %577 = vst [vmem:[%s248 + $0x70] sm:$0xff] %v555
        %578 = vst [vmem:[%s248 + $0x78] sm:$0xff] %v560
        %s579 = sand.u32 %s109, 1
        %s580 = scalar_lea.sflag [#allocation4], %s579
        %s581 = sand.u32 %s109, 1
        %s582 = smul.addr %s581, 128
        %s583 = scalar_lea.vmem [#allocation3], %s582
        // Predicated region
        $region71: #{tpu_custom_call.1} parent=65 // pred_check
          %p584 = pneg %p119
        $region72: #{tpu_custom_call.1} parent=65 // pred_check_branch
          %586 = sbr.rel (%p584) target = $region74
        $region73: #{tpu_custom_call.1} parent=65 // pred_region
          %s588 = ssub.s32 2048, 2048
          %589 = vsyncadd %s580, %s588
          %s590 = smul.addr %s21, 32
          %s591 = sadd.s32 %s22, %s590
          %s592 = smul.addr %s591, 128
          %s593 = scalar_lea.hbm %s3, %s592
          %s594 = sshll.u32 %s583, 4
          %s595 = int_to_ptr.vmem [resolvable:$true] %s594
          %600 = dma.vmem_to_hbm [thread:$0]  %s595, 2048, %s593, %s580, 128, 256, 8
        $region74: #{tpu_custom_call.1} parent=65 // pred_fallthru
          _
      $region66: #{tpu_custom_call.1} parent=5 // pred_fallthru
        _
      %p601 = scmp.le.s32.totalorder 2, %s12
      // Predicated region
      $region75: #{tpu_custom_call.1} parent=5 // pred_check
        %p602 = pneg %p601
      $region76: #{tpu_custom_call.1} parent=5 // pred_check_branch
        %604 = sbr.rel (%p602) target = $region78
      $region77: #{tpu_custom_call.1} parent=5 // pred_region
        %s605 = ssub.s32 %s12, 2
        // Predicated region
        $region79: #{tpu_custom_call.1} parent=77 // pred_check
          %p606 = pneg %p125
        $region80: #{tpu_custom_call.1} parent=77 // pred_check_branch
          %608 = sbr.rel (%p606) target = $region82
        $region81: #{tpu_custom_call.1} parent=77 // pred_region
          %s609 = sand.u32 %s110, 1
          %s610 = scalar_lea.sflag [#allocation4], %s609
          %s611 = sand.u32 %s110, 1
          %s612 = smul.addr %s611, 128
          %s613 = scalar_lea.vmem [#allocation3], %s612
          %614 = dma.done %s610, 2048
        $region82: #{tpu_custom_call.1} parent=77 // pred_fallthru
          _
      $region78: #{tpu_custom_call.1} parent=5 // pred_fallthru
        _
    $region6: #{tpu_custom_call.1} parent=1 // loop_footer
      %s16 = sadd.s32 1, %s12
    $region7: #{tpu_custom_call.1} parent=1 // loop_footer_branch
      %11 = sbr.rel target = $region3
    $region8: #{tpu_custom_call.1} parent=1 // loop_exit
      _
    %615 = vsyncpa [#allocation4], 1
    %s616 = scalar_lea.sflag [#allocation4], 1
    %617 = vsyncpa %s616, 1

</llo_original>
